<compile_context>
chip_gen: v5e
topology: v5e:2x2
jax: 0.10.0
libtpu: 0.0.40
codegen_flags: <defaults>
</compile_context>

<pallas_src>
import functools

import jax
import jax.numpy as jnp
from jax.experimental import pallas as pl
from jax.experimental.pallas import tpu as pltpu


def _cdiv(a, b):
    return (a + b - 1) // b


def _round_up(x, m):
    return ((x + m - 1) // m) * m


# ---------------------------------------------------------------------------
# Kernel
# ---------------------------------------------------------------------------
def policy_kernel(x_ref,
                  w1_ref, b1_ref,
                  w2_ref, b2_ref,
                  w3_ref, b3_ref,
                  w4_ref, b4_ref,
                  wh_ref, bh_ref,
                  out_ref,
                  *, n_actions):
    x = x_ref[...]

    # affine1 + relu
    h = jnp.dot(x, w1_ref[...], preferred_element_type=jnp.float32) + b1_ref[...]
    h = jnp.maximum(h, 0.0)

    # residual blocks: h = h + relu(affine_k(h))
    h2 = jnp.dot(h, w2_ref[...], preferred_element_type=jnp.float32) + b2_ref[...]
    h = h + jnp.maximum(h2, 0.0)

    h3 = jnp.dot(h, w3_ref[...], preferred_element_type=jnp.float32) + b3_ref[...]
    h = h + jnp.maximum(h3, 0.0)

    h4 = jnp.dot(h, w4_ref[...], preferred_element_type=jnp.float32) + b4_ref[...]
    h = h + jnp.maximum(h4, 0.0)

    # fused head: lanes [0, A) = action logits, lane A = state value, rest = pad.
    head = jnp.dot(h, wh_ref[...], preferred_element_type=jnp.float32) + bh_ref[...]

    # (1, 128) lane-id masks; broadcast inside where() -> no [tb,128] temporaries.
    col = jax.lax.broadcasted_iota(jnp.int32, (1, head.shape[1]), 1)
    is_action = col < n_actions
    is_value = col == n_actions

    # masked, max-subtracted softmax over the action lanes only
    neg_big = jnp.float32(-1e30)
    act_logits = jnp.where(is_action, head, neg_big)
    m = jnp.max(act_logits, axis=-1, keepdims=True)
    e = jnp.where(is_action, jnp.exp(act_logits - m), 0.0)
    denom = jnp.sum(e, axis=-1, keepdims=True)
    probs = e / denom  # exact normalization (one scalar per row, negligible cost)

    # lane-dense packed output: probs | value | zeros
    out_ref[...] = jnp.where(is_value, head, probs)


# ---------------------------------------------------------------------------
# Wrapper
# ---------------------------------------------------------------------------
def prepare_params(params):
    """Build the kernel-side parameter dict once (fused head slab precomputed)."""
    H = params["w1"].shape[1]
    A = params["wa"].shape[1]
    out_w = _round_up(A + 1, 128)

    wh = jnp.zeros((H, out_w), jnp.float32)
    wh = wh.at[:, :A].set(params["wa"]).at[:, A:A + 1].set(params["wv"])
    bh = jnp.zeros((1, out_w), jnp.float32)
    bh = bh.at[:, :A].set(params["ba"]).at[:, A:A + 1].set(params["bv"])

    kparams = dict(
        w1=params["w1"], b1=params["b1"],
        w2=params["w2"], b2=params["b2"],
        w3=params["w3"], b3=params["b3"],
        w4=params["w4"], b4=params["b4"],
        wh=wh, bh=bh,
    )
    return kparams, A


def _tile_batch(B, block_rows):
    """Row tiling that minimizes pad waste and keeps both v7x TCs busy."""
    n_tiles = max(1, _cdiv(B, block_rows))
    if B >= 16:
        n_tiles = max(2, n_tiles)  # shard the "parallel" axis across the 2 TCs
    tb = _round_up(_cdiv(B, n_tiles), 8)
    b_pad = n_tiles * tb
    return tb, b_pad, n_tiles


@functools.partial(jax.jit, static_argnames=("n_actions", "block_rows"))
def policy_forward(x, kparams, n_actions, block_rows=2048):
    """x: [B, D_in] float32.  kparams: output of prepare_params.

    Returns (action_probs [B, A], state_values [B, 1])."""
    B, D = x.shape
    out_w = kparams["wh"].shape[1]

    tb, b_pad, n_tiles = _tile_batch(B, block_rows)
    if b_pad != B:
        x = jnp.pad(x, ((0, b_pad - B), (0, 0)))

    operands = (
        x,
        kparams["w1"], kparams["b1"],
        kparams["w2"], kparams["b2"],
        kparams["w3"], kparams["b3"],
        kparams["w4"], kparams["b4"],
        kparams["wh"], kparams["bh"],
    )

    def resident(arr):  # full-array block, same block for every grid step
        return pl.BlockSpec(arr.shape, lambda i: (0, 0))

    in_specs = [pl.BlockSpec((tb, D), lambda i: (i, 0))]
    in_specs += [resident(a) for a in operands[1:]]

    out = pl.pallas_call(
        functools.partial(policy_kernel, n_actions=n_actions),
        out_shape=jax.ShapeDtypeStruct((b_pad, out_w), jnp.float32),
        grid=(n_tiles,),
        in_specs=in_specs,
        out_specs=pl.BlockSpec((tb, out_w), lambda i: (i, 0)),
        compiler_params=pltpu.CompilerParams(
            dimension_semantics=("parallel",)),
    )(*operands)

    probs = out[:B, :n_actions]
    values = out[:B, n_actions:n_actions + 1]
    return probs, values


# ---------------------------------------------------------------------------
# Params / reference
# ---------------------------------------------------------------------------
def init_params(key, in_dim, hidden, n_actions):
    """Deterministic init mimicking nn.Linear's U(-1/sqrt(fan_in), 1/sqrt(fan_in))."""
    def linear(k, fan_in, fan_out):
        kw, kb = jax.random.split(k)
        bound = 1.0 / jnp.sqrt(jnp.float32(fan_in))
        w = jax.random.uniform(kw, (fan_in, fan_out), jnp.float32, -bound, bound)
        b = jax.random.uniform(kb, (1, fan_out), jnp.float32, -bound, bound)
        return w, b

    keys = jax.random.split(key, 6)
    w1, b1 = linear(keys[0], in_dim, hidden)
    w2, b2 = linear(keys[1], hidden, hidden)
    w3, b3 = linear(keys[2], hidden, hidden)
    w4, b4 = linear(keys[3], hidden, hidden)
    wa, ba = linear(keys[4], hidden, n_actions)
    wv, bv = linear(keys[5], hidden, 1)
    return dict(w1=w1, b1=b1, w2=w2, b2=b2, w3=w3, b3=b3, w4=w4, b4=b4,
                wa=wa, ba=ba, wv=wv, bv=bv)


def reference_forward(x, p):
    """Pure-JAX reference matching the PyTorch forward."""
    h = jax.nn.relu(x @ p["w1"] + p["b1"])
    h = h + jax.nn.relu(h @ p["w2"] + p["b2"])
    h = h + jax.nn.relu(h @ p["w3"] + p["b3"])
    h = h + jax.nn.relu(h @ p["w4"] + p["b4"])
    probs = jax.nn.softmax(h @ p["wa"] + p["ba"], axis=-1)
    values = h @ p["wv"] + p["bv"]
    return probs, values


if __name__ == "__main__":
    # FLAGS stand-ins: episode_len=5, len(flags)=8 actions, hidden_size=32
    episode_len = 5
    n_flags = 8
    hidden_size = 32
    in_dim = (episode_len - 1) * n_flags  # 32

    key = jax.random.PRNGKey(0)
    k_params, k_x1, k_x2, k_x3 = jax.random.split(key, 4)
    params = init_params(k_params, in_dim, hidden_size, n_flags)
    kparams, n_actions = prepare_params(params)

    ok = True
    # small batch (single-step policy eval, grid forced to 1 tile), a mid-size
    # rollout batch (forced 2-tile grid -> both v7x TCs, tight 2x152 tiling),
    # and a larger batch that still fits one tall tile per TC.
    for k_x, batch in ((k_x1, 2), (k_x2, 300), (k_x3, 1000)):
        x = jax.random.normal(k_x, (batch, in_dim), jnp.float32)

        probs, values = policy_forward(x, kparams, n_actions)
        probs = jax.block_until_ready(probs)
        values = jax.block_until_ready(values)

        ref_probs, ref_values = reference_forward(x, params)
        ok &= bool(jnp.allclose(probs, ref_probs, atol=1e-4, rtol=1e-4))
        ok &= bool(jnp.allclose(values, ref_values, atol=1e-4, rtol=1e-4))
        ok &= bool(jnp.allclose(jnp.sum(probs, axis=-1), 1.0, atol=1e-3))
        ok &= probs.shape == (batch, n_flags) and values.shape == (batch, 1)

    assert ok, "mismatch vs pure-JAX reference"
    print("KERNEL_OK")
</pallas_src>

<mosaic_0001>
module attributes {stable_mosaic.version = 11 : i64} {
  func.func @policy_kernel(%arg0: i32, %arg1: memref<8x32xf32, #tpu.memory_space<vmem>>, %arg2: memref<32x32xf32, #tpu.memory_space<vmem>>, %arg3: memref<1x32xf32, #tpu.memory_space<vmem>>, %arg4: memref<32x32xf32, #tpu.memory_space<vmem>>, %arg5: memref<1x32xf32, #tpu.memory_space<vmem>>, %arg6: memref<32x32xf32, #tpu.memory_space<vmem>>, %arg7: memref<1x32xf32, #tpu.memory_space<vmem>>, %arg8: memref<32x32xf32, #tpu.memory_space<vmem>>, %arg9: memref<1x32xf32, #tpu.memory_space<vmem>>, %arg10: memref<32x128xf32, #tpu.memory_space<vmem>>, %arg11: memref<1x128xf32, #tpu.memory_space<vmem>>, %arg12: memref<8x128xf32, #tpu.memory_space<vmem>>) attributes {dimension_semantics = [#tpu.dimension_semantics<parallel>], iteration_bounds = array<i64: 1>, scalar_prefetch = 0 : i64, scratch_operands = 0 : i64, tpu.core_type = #tpu.core_type<tc>, window_params = [{transform_indices = @transform_0, window_bounds = array<i64: 8, 32>}, {pipeline_mode = #tpu.pipeline_mode<synchronous>, transform_indices = @transform_1, window_bounds = array<i64: 32, 32>}, {pipeline_mode = #tpu.pipeline_mode<synchronous>, transform_indices = @transform_2, window_bounds = array<i64: 1, 32>}, {pipeline_mode = #tpu.pipeline_mode<synchronous>, transform_indices = @transform_3, window_bounds = array<i64: 32, 32>}, {pipeline_mode = #tpu.pipeline_mode<synchronous>, transform_indices = @transform_4, window_bounds = array<i64: 1, 32>}, {pipeline_mode = #tpu.pipeline_mode<synchronous>, transform_indices = @transform_5, window_bounds = array<i64: 32, 32>}, {pipeline_mode = #tpu.pipeline_mode<synchronous>, transform_indices = @transform_6, window_bounds = array<i64: 1, 32>}, {pipeline_mode = #tpu.pipeline_mode<synchronous>, transform_indices = @transform_7, window_bounds = array<i64: 32, 32>}, {pipeline_mode = #tpu.pipeline_mode<synchronous>, transform_indices = @transform_8, window_bounds = array<i64: 1, 32>}, {pipeline_mode = #tpu.pipeline_mode<synchronous>, transform_indices = @transform_9, window_bounds = array<i64: 32, 128>}, {pipeline_mode = #tpu.pipeline_mode<synchronous>, transform_indices = @transform_10, window_bounds = array<i64: 1, 128>}, {transform_indices = @transform_11, window_bounds = array<i64: 8, 128>}]} {
    %c0 = arith.constant 0 : index
    %c0_0 = arith.constant 0 : index
    %0 = vector.load %arg1[%c0, %c0_0] : memref<8x32xf32, #tpu.memory_space<vmem>>, vector<8x32xf32>
    %c0_1 = arith.constant 0 : index
    %c0_2 = arith.constant 0 : index
    %1 = vector.load %arg2[%c0_1, %c0_2] : memref<32x32xf32, #tpu.memory_space<vmem>>, vector<32x32xf32>
    %cst = arith.constant dense<0.000000e+00> : vector<8x32xf32>
    %2 = tpu.matmul %0, %1, %cst {dimension_numbers = #tpu.dot_dimension_numbers<[1], [0], [0], [1], [0, 0, 1, 1], [], []>} : vector<8x32xf32>, vector<32x32xf32>, vector<8x32xf32> -> vector<8x32xf32>
    %c0_3 = arith.constant 0 : index
    %c0_4 = arith.constant 0 : index
    %3 = vector.load %arg3[%c0_3, %c0_4] : memref<1x32xf32, #tpu.memory_space<vmem>>, vector<1x32xf32>
    %4 = vector.broadcast %3 : vector<1x32xf32> to vector<8x32xf32>
    %5 = arith.addf %2, %4 : vector<8x32xf32>
    %cst_5 = arith.constant 0.000000e+00 : f32
    %6 = vector.broadcast %cst_5 : f32 to vector<8x32xf32>
    %7 = arith.maximumf %5, %6 : vector<8x32xf32>
    %c0_6 = arith.constant 0 : index
    %c0_7 = arith.constant 0 : index
    %8 = vector.load %arg4[%c0_6, %c0_7] : memref<32x32xf32, #tpu.memory_space<vmem>>, vector<32x32xf32>
    %cst_8 = arith.constant dense<0.000000e+00> : vector<8x32xf32>
    %9 = tpu.matmul %7, %8, %cst_8 {dimension_numbers = #tpu.dot_dimension_numbers<[1], [0], [0], [1], [0, 0, 1, 1], [], []>} : vector<8x32xf32>, vector<32x32xf32>, vector<8x32xf32> -> vector<8x32xf32>
    %c0_9 = arith.constant 0 : index
    %c0_10 = arith.constant 0 : index
    %10 = vector.load %arg5[%c0_9, %c0_10] : memref<1x32xf32, #tpu.memory_space<vmem>>, vector<1x32xf32>
    %11 = vector.broadcast %10 : vector<1x32xf32> to vector<8x32xf32>
    %12 = arith.addf %9, %11 : vector<8x32xf32>
    %cst_11 = arith.constant 0.000000e+00 : f32
    %13 = vector.broadcast %cst_11 : f32 to vector<8x32xf32>
    %14 = arith.maximumf %12, %13 : vector<8x32xf32>
    %15 = arith.addf %7, %14 : vector<8x32xf32>
    %c0_12 = arith.constant 0 : index
    %c0_13 = arith.constant 0 : index
    %16 = vector.load %arg6[%c0_12, %c0_13] : memref<32x32xf32, #tpu.memory_space<vmem>>, vector<32x32xf32>
    %cst_14 = arith.constant dense<0.000000e+00> : vector<8x32xf32>
    %17 = tpu.matmul %15, %16, %cst_14 {dimension_numbers = #tpu.dot_dimension_numbers<[1], [0], [0], [1], [0, 0, 1, 1], [], []>} : vector<8x32xf32>, vector<32x32xf32>, vector<8x32xf32> -> vector<8x32xf32>
    %c0_15 = arith.constant 0 : index
    %c0_16 = arith.constant 0 : index
    %18 = vector.load %arg7[%c0_15, %c0_16] : memref<1x32xf32, #tpu.memory_space<vmem>>, vector<1x32xf32>
    %19 = vector.broadcast %18 : vector<1x32xf32> to vector<8x32xf32>
    %20 = arith.addf %17, %19 : vector<8x32xf32>
    %cst_17 = arith.constant 0.000000e+00 : f32
    %21 = vector.broadcast %cst_17 : f32 to vector<8x32xf32>
    %22 = arith.maximumf %20, %21 : vector<8x32xf32>
    %23 = arith.addf %15, %22 : vector<8x32xf32>
    %c0_18 = arith.constant 0 : index
    %c0_19 = arith.constant 0 : index
    %24 = vector.load %arg8[%c0_18, %c0_19] : memref<32x32xf32, #tpu.memory_space<vmem>>, vector<32x32xf32>
    %cst_20 = arith.constant dense<0.000000e+00> : vector<8x32xf32>
    %25 = tpu.matmul %23, %24, %cst_20 {dimension_numbers = #tpu.dot_dimension_numbers<[1], [0], [0], [1], [0, 0, 1, 1], [], []>} : vector<8x32xf32>, vector<32x32xf32>, vector<8x32xf32> -> vector<8x32xf32>
    %c0_21 = arith.constant 0 : index
    %c0_22 = arith.constant 0 : index
    %26 = vector.load %arg9[%c0_21, %c0_22] : memref<1x32xf32, #tpu.memory_space<vmem>>, vector<1x32xf32>
    %27 = vector.broadcast %26 : vector<1x32xf32> to vector<8x32xf32>
    %28 = arith.addf %25, %27 : vector<8x32xf32>
    %cst_23 = arith.constant 0.000000e+00 : f32
    %29 = vector.broadcast %cst_23 : f32 to vector<8x32xf32>
    %30 = arith.maximumf %28, %29 : vector<8x32xf32>
    %31 = arith.addf %23, %30 : vector<8x32xf32>
    %c0_24 = arith.constant 0 : index
    %c0_25 = arith.constant 0 : index
    %32 = vector.load %arg10[%c0_24, %c0_25] : memref<32x128xf32, #tpu.memory_space<vmem>>, vector<32x128xf32>
    %cst_26 = arith.constant dense<0.000000e+00> : vector<8x128xf32>
    %33 = tpu.matmul %31, %32, %cst_26 {dimension_numbers = #tpu.dot_dimension_numbers<[1], [0], [0], [1], [0, 0, 1, 1], [], []>} : vector<8x32xf32>, vector<32x128xf32>, vector<8x128xf32> -> vector<8x128xf32>
    %c0_27 = arith.constant 0 : index
    %c0_28 = arith.constant 0 : index
    %34 = vector.load %arg11[%c0_27, %c0_28] : memref<1x128xf32, #tpu.memory_space<vmem>>, vector<1x128xf32>
    %35 = vector.broadcast %34 : vector<1x128xf32> to vector<8x128xf32>
    %36 = arith.addf %33, %35 : vector<8x128xf32>
    %37 = tpu.iota {dimensions = array<i32: 1>} : vector<1x128xi32>
    %c8_i32 = arith.constant 8 : i32
    %38 = vector.broadcast %c8_i32 : i32 to vector<1x128xi32>
    %39 = arith.cmpi slt, %37, %38 : vector<1x128xi32>
    %c8_i32_29 = arith.constant 8 : i32
    %40 = vector.broadcast %c8_i32_29 : i32 to vector<1x128xi32>
    %41 = arith.cmpi eq, %37, %40 : vector<1x128xi32>
    %cst_30 = arith.constant -1.000000e+30 : f32
    %42 = vector.shape_cast %39 : vector<1x128xi1> to vector<1x128xi1>
    %43 = vector.broadcast %42 : vector<1x128xi1> to vector<8x128xi1>
    %44 = vector.broadcast %cst_30 : f32 to vector<8x128xf32>
    %45 = arith.select %43, %36, %44 : vector<8x128xi1>, vector<8x128xf32>
    %cst_31 = arith.constant dense<0xFF800000> : vector<8xf32>
    %46 = vector.multi_reduction <maximumf>, %45, %cst_31 [1] : vector<8x128xf32> to vector<8xf32>
    %47 = vector.shape_cast %46 : vector<8xf32> to vector<8x1xf32>
    %48 = vector.broadcast %47 : vector<8x1xf32> to vector<8x128xf32>
    %49 = arith.subf %45, %48 : vector<8x128xf32>
    %50 = math.exp %49 : vector<8x128xf32>
    %cst_32 = arith.constant 0.000000e+00 : f32
    %51 = vector.shape_cast %39 : vector<1x128xi1> to vector<1x128xi1>
    %52 = vector.broadcast %51 : vector<1x128xi1> to vector<8x128xi1>
    %53 = vector.broadcast %cst_32 : f32 to vector<8x128xf32>
    %54 = arith.select %52, %50, %53 : vector<8x128xi1>, vector<8x128xf32>
    %cst_33 = arith.constant dense<0.000000e+00> : vector<8xf32>
    %55 = vector.multi_reduction <add>, %54, %cst_33 [1] : vector<8x128xf32> to vector<8xf32>
    %56 = vector.shape_cast %55 : vector<8xf32> to vector<8x1xf32>
    %57 = vector.broadcast %56 : vector<8x1xf32> to vector<8x128xf32>
    %58 = arith.divf %54, %57 : vector<8x128xf32>
    %59 = vector.shape_cast %41 : vector<1x128xi1> to vector<1x128xi1>
    %60 = vector.broadcast %59 : vector<1x128xi1> to vector<8x128xi1>
    %61 = arith.select %60, %36, %58 : vector<8x128xi1>, vector<8x128xf32>
    %c0_34 = arith.constant 0 : index
    %c0_35 = arith.constant 0 : index
    %62 = vector.load %arg12[%c0_34, %c0_35] : memref<8x128xf32, #tpu.memory_space<vmem>>, vector<8x128xf32>
    tpu.vector_store %arg12[%c0_34, %c0_35], %61 {strides = array<i32>} : memref<8x128xf32, #tpu.memory_space<vmem>>, vector<8x128xf32>,
    return
  }
  func.func @transform_0(%arg0: i32) -> (i32, i32) {
    %c0_i32 = arith.constant 0 : i32
    %c0_i32_0 = arith.constant 0 : i32
    return %arg0, %c0_i32 : i32, i32
  }
  func.func @transform_1(%arg0: i32) -> (i32, i32) {
    %c0_i32 = arith.constant 0 : i32
    %c0_i32_0 = arith.constant 0 : i32
    %c0_i32_1 = arith.constant 0 : i32
    return %c0_i32, %c0_i32_0 : i32, i32
  }
  func.func @transform_2(%arg0: i32) -> (i32, i32) {
    %c0_i32 = arith.constant 0 : i32
    %c0_i32_0 = arith.constant 0 : i32
    %c0_i32_1 = arith.constant 0 : i32
    return %c0_i32, %c0_i32_0 : i32, i32
  }
  func.func @transform_3(%arg0: i32) -> (i32, i32) {
    %c0_i32 = arith.constant 0 : i32
    %c0_i32_0 = arith.constant 0 : i32
    %c0_i32_1 = arith.constant 0 : i32
    return %c0_i32, %c0_i32_0 : i32, i32
  }
  func.func @transform_4(%arg0: i32) -> (i32, i32) {
    %c0_i32 = arith.constant 0 : i32
    %c0_i32_0 = arith.constant 0 : i32
    %c0_i32_1 = arith.constant 0 : i32
    return %c0_i32, %c0_i32_0 : i32, i32
  }
  func.func @transform_5(%arg0: i32) -> (i32, i32) {
    %c0_i32 = arith.constant 0 : i32
    %c0_i32_0 = arith.constant 0 : i32
    %c0_i32_1 = arith.constant 0 : i32
    return %c0_i32, %c0_i32_0 : i32, i32
  }
  func.func @transform_6(%arg0: i32) -> (i32, i32) {
    %c0_i32 = arith.constant 0 : i32
    %c0_i32_0 = arith.constant 0 : i32
    %c0_i32_1 = arith.constant 0 : i32
    return %c0_i32, %c0_i32_0 : i32, i32
  }
  func.func @transform_7(%arg0: i32) -> (i32, i32) {
    %c0_i32 = arith.constant 0 : i32
    %c0_i32_0 = arith.constant 0 : i32
    %c0_i32_1 = arith.constant 0 : i32
    return %c0_i32, %c0_i32_0 : i32, i32
  }
  func.func @transform_8(%arg0: i32) -> (i32, i32) {
    %c0_i32 = arith.constant 0 : i32
    %c0_i32_0 = arith.constant 0 : i32
    %c0_i32_1 = arith.constant 0 : i32
    return %c0_i32, %c0_i32_0 : i32, i32
  }
  func.func @transform_9(%arg0: i32) -> (i32, i32) {
    %c0_i32 = arith.constant 0 : i32
    %c0_i32_0 = arith.constant 0 : i32
    %c0_i32_1 = arith.constant 0 : i32
    return %c0_i32, %c0_i32_0 : i32, i32
  }
  func.func @transform_10(%arg0: i32) -> (i32, i32) {
    %c0_i32 = arith.constant 0 : i32
    %c0_i32_0 = arith.constant 0 : i32
    %c0_i32_1 = arith.constant 0 : i32
    return %c0_i32, %c0_i32_0 : i32, i32
  }
  func.func @transform_11(%arg0: i32) -> (i32, i32) {
    %c0_i32 = arith.constant 0 : i32
    %c0_i32_0 = arith.constant 0 : i32
    return %arg0, %c0_i32 : i32, i32
  }
}

</mosaic_0001>

<llo_original>
// kernel: policy_forward.1
$region0: #{policy_forward.1}
  #allocation0 [shape = 'u32[]', space=smem, size = 0x4, offset = 0x4, fixed_abs, tag = 'smem constant byte address 0x4 - core index']
  #allocation1 [shape = 'u32[72,128]{1,0:T(1,128)}', space=vmem, size = 0x9000, scoped, tag = 'internal scratch']
  %s0 = inlined_call_operand.vmem [shape: f32[8,32], index: 0, kind: input, shape index: {}]
  %s1 = inlined_call_operand.hbm [shape: f32[32,32], index: 1, kind: input, shape index: {}]
  %s2 = inlined_call_operand.vmem [shape: f32[1,32], index: 2, kind: input, shape index: {}]
  %s3 = inlined_call_operand.hbm [shape: f32[32,32], index: 3, kind: input, shape index: {}]
  %s4 = inlined_call_operand.vmem [shape: f32[1,32], index: 4, kind: input, shape index: {}]
  %s5 = inlined_call_operand.hbm [shape: f32[32,32], index: 5, kind: input, shape index: {}]
  %s6 = inlined_call_operand.vmem [shape: f32[1,32], index: 6, kind: input, shape index: {}]
  %s7 = inlined_call_operand.hbm [shape: f32[32,32], index: 7, kind: input, shape index: {}]
  %s8 = inlined_call_operand.vmem [shape: f32[1,32], index: 8, kind: input, shape index: {}]
  %s9 = inlined_call_operand.hbm [shape: f32[32,128], index: 9, kind: input, shape index: {}]
  %s10 = inlined_call_operand.vmem [shape: f32[1,128], index: 10, kind: input, shape index: {}]
  %s11 = inlined_call_operand.vmem [shape: f32[8,128], index: 11, kind: output, shape index: {}]
  %s12 = sld [smem:[#allocation0]]
  $region74: #{policy_forward.1} parent=0
    _
  %s14 = ssub.s32 1, %s12
  %s15 = scalar_select 0, %s14, %s12
  $region1: #{policy_forward.1} parent=0
    #allocation2 [shape = 'u8[16384]{0}', space=vmem, size = 0x4000, scoped, tag = 'input window, operand 1, single buffered']
    #allocation3 [shape = 's32[1]{0}', space=sflag, size = 0x4, scoped, tag = 'scoped memory for policy_forward.1']
    #allocation4 [shape = 'u8[16384]{0}', space=vmem, size = 0x4000, scoped, tag = 'input window, operand 3, single buffered']
    #allocation5 [shape = 's32[1]{0}', space=sflag, size = 0x4, scoped, tag = 'scoped memory for policy_forward.1']
    #allocation6 [shape = 'u8[16384]{0}', space=vmem, size = 0x4000, scoped, tag = 'input window, operand 5, single buffered']
    #allocation7 [shape = 'u8[16384]{0}', space=vmem, size = 0x4000, scoped, tag = 'input window, operand 7, single buffered']
    #allocation8 [shape = 's32[1]{0}', space=sflag, size = 0x4, scoped, tag = 'scoped memory for policy_forward.1']
    #allocation9 [shape = 'u8[16384]{0}', space=vmem, size = 0x4000, scoped, tag = 'input window, operand 9, single buffered']
    %16 = vsyncpa [#allocation3], 0
    %17 = vsyncpa [#allocation5], 0
    %18 = vsyncpa [#allocation8], 0
    // Predicated region
    $region2: #{policy_forward.1} parent=1 // pred_check
      _
    $region3: #{policy_forward.1} parent=1 // pred_check_branch
      %20 = sbr.rel (0) target = $region5
    $region4: #{policy_forward.1} parent=1 // pred_region
      _
    $region5: #{policy_forward.1} parent=1 // pred_fallthru
      _
    // Predicated region
    $region6: #{policy_forward.1} parent=1 // pred_check
      _
    $region7: #{policy_forward.1} parent=1 // pred_check_branch
      %22 = sbr.rel (0) target = $region9
    $region8: #{policy_forward.1} parent=1 // pred_region
      %24 = vsyncadd [#allocation3], 0
      %s25 = sshll.u32 %s1, 4
      %s26 = int_to_ptr.hbm [resolvable:$true] %s25
      %s27 = sshll.u32 [#allocation2], 4
      %s28 = int_to_ptr.vmem [resolvable:$true] %s27
      %33 = dma.hbm_to_vmem [thread:$0]  %s26, 512, %s28, [#allocation3], 128, 128, 8
    $region9: #{policy_forward.1} parent=1 // pred_fallthru
      _
    // Predicated region
    $region10: #{policy_forward.1} parent=1 // pred_check
      _
    $region11: #{policy_forward.1} parent=1 // pred_check_branch
      %35 = sbr.rel (0) target = $region13
    $region12: #{policy_forward.1} parent=1 // pred_region
      _
    $region13: #{policy_forward.1} parent=1 // pred_fallthru
      _
    // Predicated region
    $region14: #{policy_forward.1} parent=1 // pred_check
      _
    $region15: #{policy_forward.1} parent=1 // pred_check_branch
      %37 = sbr.rel (0) target = $region17
    $region16: #{policy_forward.1} parent=1 // pred_region
      %39 = vsyncadd [#allocation5], 0
      %s40 = sshll.u32 %s3, 4
      %s41 = int_to_ptr.hbm [resolvable:$true] %s40
      %s42 = sshll.u32 [#allocation4], 4
      %s43 = int_to_ptr.vmem [resolvable:$true] %s42
      %48 = dma.hbm_to_vmem [thread:$0]  %s41, 512, %s43, [#allocation5], 128, 128, 8
    $region17: #{policy_forward.1} parent=1 // pred_fallthru
      _
    // Predicated region
    $region18: #{policy_forward.1} parent=1 // pred_check
      _
    $region19: #{policy_forward.1} parent=1 // pred_check_branch
      %50 = sbr.rel (0) target = $region21
    $region20: #{policy_forward.1} parent=1 // pred_region
      _
    $region21: #{policy_forward.1} parent=1 // pred_fallthru
      _
    // Predicated region
    $region22: #{policy_forward.1} parent=1 // pred_check
      _
    $region23: #{policy_forward.1} parent=1 // pred_check_branch
      %52 = sbr.rel (0) target = $region25
    $region24: #{policy_forward.1} parent=1 // pred_region
      %54 = vsyncadd [#allocation5], 0
      %s55 = sshll.u32 %s5, 4
      %s56 = int_to_ptr.hbm [resolvable:$true] %s55
      %s57 = sshll.u32 [#allocation6], 4
      %s58 = int_to_ptr.vmem [resolvable:$true] %s57
      %63 = dma.hbm_to_vmem [thread:$0]  %s56, 512, %s58, [#allocation5], 128, 128, 8
    $region25: #{policy_forward.1} parent=1 // pred_fallthru
      _
    // Predicated region
    $region26: #{policy_forward.1} parent=1 // pred_check
      _
    $region27: #{policy_forward.1} parent=1 // pred_check_branch
      %65 = sbr.rel (0) target = $region29
    $region28: #{policy_forward.1} parent=1 // pred_region
      _
    $region29: #{policy_forward.1} parent=1 // pred_fallthru
      _
    // Predicated region
    $region30: #{policy_forward.1} parent=1 // pred_check
      _
    $region31: #{policy_forward.1} parent=1 // pred_check_branch
      %67 = sbr.rel (0) target = $region33
    $region32: #{policy_forward.1} parent=1 // pred_region
      %69 = vsyncadd [#allocation8], 0
      %s70 = sshll.u32 %s7, 4
      %s71 = int_to_ptr.hbm [resolvable:$true] %s70
      %s72 = sshll.u32 [#allocation7], 4
      %s73 = int_to_ptr.vmem [resolvable:$true] %s72
      %78 = dma.hbm_to_vmem [thread:$0]  %s71, 512, %s73, [#allocation8], 128, 128, 8
    $region33: #{policy_forward.1} parent=1 // pred_fallthru
      _
    // Predicated region
    $region34: #{policy_forward.1} parent=1 // pred_check
      _
    $region35: #{policy_forward.1} parent=1 // pred_check_branch
      %80 = sbr.rel (0) target = $region37
    $region36: #{policy_forward.1} parent=1 // pred_region
      _
    $region37: #{policy_forward.1} parent=1 // pred_fallthru
      _
    // Predicated region
    $region38: #{policy_forward.1} parent=1 // pred_check
      _
    $region39: #{policy_forward.1} parent=1 // pred_check_branch
      %82 = sbr.rel (0) target = $region41
    $region40: #{policy_forward.1} parent=1 // pred_region
      %84 = vsyncadd [#allocation8], 0
      %s85 = sshll.u32 %s9, 4
      %s86 = int_to_ptr.hbm [resolvable:$true] %s85
      %s87 = sshll.u32 [#allocation9], 4
      %s88 = int_to_ptr.vmem [resolvable:$true] %s87
      %93 = dma.hbm_to_vmem [thread:$0]  %s86, 512, %s88, [#allocation8], 128, 128, 8
    $region41: #{policy_forward.1} parent=1 // pred_fallthru
      _
    // Predicated region
    $region42: #{policy_forward.1} parent=1 // pred_check
      _
    $region43: #{policy_forward.1} parent=1 // pred_check_branch
      %95 = sbr.rel (0) target = $region45
    $region44: #{policy_forward.1} parent=1 // pred_region
      _
    $region45: #{policy_forward.1} parent=1 // pred_fallthru
      _
    // Predicated region
    $region46: #{policy_forward.1} parent=1 // pred_check
      _
    $region47: #{policy_forward.1} parent=1 // pred_check_branch
      %97 = sbr.rel (0) target = $region49
    $region48: #{policy_forward.1} parent=1 // pred_region
      %99 = dma.done [#allocation3], 512
    $region49: #{policy_forward.1} parent=1 // pred_fallthru
      _
    // Predicated region
    $region50: #{policy_forward.1} parent=1 // pred_check
      _
    $region51: #{policy_forward.1} parent=1 // pred_check_branch
      %101 = sbr.rel (0) target = $region53
    $region52: #{policy_forward.1} parent=1 // pred_region
      %103 = dma.done [#allocation5], 512
    $region53: #{policy_forward.1} parent=1 // pred_fallthru
      _
    // Predicated region
    $region54: #{policy_forward.1} parent=1 // pred_check
      _
    $region55: #{policy_forward.1} parent=1 // pred_check_branch
      %105 = sbr.rel (0) target = $region57
    $region56: #{policy_forward.1} parent=1 // pred_region
      %107 = dma.done [#allocation5], 512
    $region57: #{policy_forward.1} parent=1 // pred_fallthru
      _
    // Predicated region
    $region58: #{policy_forward.1} parent=1 // pred_check
      _
    $region59: #{policy_forward.1} parent=1 // pred_check_branch
      %109 = sbr.rel (0) target = $region61
    $region60: #{policy_forward.1} parent=1 // pred_region
      %111 = dma.done [#allocation8], 512
    $region61: #{policy_forward.1} parent=1 // pred_fallthru
      _
    // Predicated region
    $region62: #{policy_forward.1} parent=1 // pred_check
      _
    $region63: #{policy_forward.1} parent=1 // pred_check_branch
      %113 = sbr.rel (0) target = $region65
    $region64: #{policy_forward.1} parent=1 // pred_region
      %115 = dma.done [#allocation8], 512
    $region65: #{policy_forward.1} parent=1 // pred_fallthru
      _
    %v116 = vld [vmem:[%s0] sm:$0xff]
    %v117 = vld [vmem:[#allocation2] sm:$0xff]
    %v118 = vld [vmem:[#allocation2 + $0x8] sm:$0xff]
    %v119 = vld [vmem:[#allocation2 + $0x10] sm:$0xff]
    %v120 = vld [vmem:[#allocation2 + $0x18] sm:$0xff]
    %v121 = vld [vmem:[%s2] sm:$0x1]
    %v123 = vperm.slane %v121, 0
    %vm125 = vcmask 261120
    %v127 = vsel %vm125, %v116, 0
    %129 = vmatpush.msra.mxu0 0.0
    %130 = vmatpush.msra.mxu0 0.0
    %131 = vmatpush.msra.mxu0 0.0
    %132 = vmatpush.msra.mxu0 0.0
    %133 = vmatpush.msra.mxu0 0.0
    %134 = vmatpush.msra.mxu0 0.0
    %135 = vmatpush.msra.mxu0 0.0
    %136 = vmatpush.msra.mxu0 0.0
    %137 = vmatpush.msra.mxu0 0.0
    %138 = vmatpush.msra.mxu0 0.0
    %139 = vmatpush.msra.mxu0 0.0
    %140 = vmatpush.msra.mxu0 0.0
    %141 = vmatpush.msra.mxu0 %v120
    %142 = vmatpush.msra.mxu0 %v119
    %143 = vmatpush.msra.mxu0 %v118
    %144 = vmatpush.msra.mxu0 %v117
    %145 = vmatmul.f32.gmra.mxu0 %v127
    %v146 = vpop.f32.mrf.mxu0
    %v147 = vadd.f32 %v123, %v146
    %148 = vdwg.mxu0
    %v149 = vmax.f32 %v147, 0.0
    %v150 = vld [vmem:[#allocation4] sm:$0xff]
    %v151 = vld [vmem:[#allocation4 + $0x8] sm:$0xff]
    %v152 = vld [vmem:[#allocation4 + $0x10] sm:$0xff]
    %v153 = vld [vmem:[#allocation4 + $0x18] sm:$0xff]
    %v154 = vld [vmem:[%s4] sm:$0x1]
    %v156 = vperm.slane %v154, 0
    %v159 = vsel %vm125, %v149, 0
    %161 = vmatpush.msra.mxu0 0.0
    %162 = vmatpush.msra.mxu0 0.0
    %163 = vmatpush.msra.mxu0 0.0
    %164 = vmatpush.msra.mxu0 0.0
    %165 = vmatpush.msra.mxu0 0.0
    %166 = vmatpush.msra.mxu0 0.0
    %167 = vmatpush.msra.mxu0 0.0
    %168 = vmatpush.msra.mxu0 0.0
    %169 = vmatpush.msra.mxu0 0.0
    %170 = vmatpush.msra.mxu0 0.0
    %171 = vmatpush.msra.mxu0 0.0
    %172 = vmatpush.msra.mxu0 0.0
    %173 = vmatpush.msra.mxu0 %v153
    %174 = vmatpush.msra.mxu0 %v152
    %175 = vmatpush.msra.mxu0 %v151
    %176 = vmatpush.msra.mxu0 %v150
    %177 = vmatmul.f32.gmra.mxu0 %v159
    %v178 = vpop.f32.mrf.mxu0
    %v179 = vadd.f32 %v156, %v178
    %180 = vdwg.mxu0
    %v181 = vmax.f32 %v179, 0.0
    %v182 = vadd.f32 %v149, %v181
    %v183 = vld [vmem:[#allocation6] sm:$0xff]
    %v184 = vld [vmem:[#allocation6 + $0x8] sm:$0xff]
    %v185 = vld [vmem:[#allocation6 + $0x10] sm:$0xff]
    %v186 = vld [vmem:[#allocation6 + $0x18] sm:$0xff]
    %v187 = vld [vmem:[%s6] sm:$0x1]
    %v189 = vperm.slane %v187, 0
    %v192 = vsel %vm125, %v182, 0
    %194 = vmatpush.msra.mxu0 0.0
    %195 = vmatpush.msra.mxu0 0.0
    %196 = vmatpush.msra.mxu0 0.0
    %197 = vmatpush.msra.mxu0 0.0
    %198 = vmatpush.msra.mxu0 0.0
    %199 = vmatpush.msra.mxu0 0.0
    %200 = vmatpush.msra.mxu0 0.0
    %201 = vmatpush.msra.mxu0 0.0
    %202 = vmatpush.msra.mxu0 0.0
    %203 = vmatpush.msra.mxu0 0.0
    %204 = vmatpush.msra.mxu0 0.0
    %205 = vmatpush.msra.mxu0 0.0
    %206 = vmatpush.msra.mxu0 %v186
    %207 = vmatpush.msra.mxu0 %v185
    %208 = vmatpush.msra.mxu0 %v184
    %209 = vmatpush.msra.mxu0 %v183
    %210 = vmatmul.f32.gmra.mxu0 %v192
    %v211 = vpop.f32.mrf.mxu0
    %v212 = vadd.f32 %v189, %v211
    %213 = vdwg.mxu0
    %v214 = vmax.f32 %v212, 0.0
    %v215 = vadd.f32 %v182, %v214
    %v216 = vld [vmem:[#allocation7] sm:$0xff]
    %v217 = vld [vmem:[#allocation7 + $0x8] sm:$0xff]
    %v218 = vld [vmem:[#allocation7 + $0x10] sm:$0xff]
    %v219 = vld [vmem:[#allocation7 + $0x18] sm:$0xff]
    %v220 = vld [vmem:[%s8] sm:$0x1]
    %v222 = vperm.slane %v220, 0
    %v225 = vsel %vm125, %v215, 0
    %227 = vmatpush.msra.mxu0 0.0
    %228 = vmatpush.msra.mxu0 0.0
    %229 = vmatpush.msra.mxu0 0.0
    %230 = vmatpush.msra.mxu0 0.0
    %231 = vmatpush.msra.mxu0 0.0
    %232 = vmatpush.msra.mxu0 0.0
    %233 = vmatpush.msra.mxu0 0.0
    %234 = vmatpush.msra.mxu0 0.0
    %235 = vmatpush.msra.mxu0 0.0
    %236 = vmatpush.msra.mxu0 0.0
    %237 = vmatpush.msra.mxu0 0.0
    %238 = vmatpush.msra.mxu0 0.0
    %239 = vmatpush.msra.mxu0 %v219
    %240 = vmatpush.msra.mxu0 %v218
    %241 = vmatpush.msra.mxu0 %v217
    %242 = vmatpush.msra.mxu0 %v216
    %243 = vmatmul.f32.gmra.mxu0 %v225
    %v244 = vpop.f32.mrf.mxu0
    %v245 = vadd.f32 %v222, %v244
    %246 = vdwg.mxu0
    %v247 = vmax.f32 %v245, 0.0
    %v248 = vadd.f32 %v215, %v247
    %v249 = vld [vmem:[#allocation9] sm:$0xff]
    %v250 = vld [vmem:[#allocation9 + $0x8] sm:$0xff]
    %v251 = vld [vmem:[#allocation9 + $0x10] sm:$0xff]
    %v252 = vld [vmem:[#allocation9 + $0x18] sm:$0xff]
    %v253 = vld [vmem:[%s10] sm:$0x1]
    %v255 = vperm.slane %v253, 0
    %v258 = vsel %vm125, %v248, 0
    %260 = vmatpush.msra.mxu0 0.0
    %261 = vmatpush.msra.mxu0 0.0
    %262 = vmatpush.msra.mxu0 0.0
    %263 = vmatpush.msra.mxu0 0.0
    %264 = vmatpush.msra.mxu0 0.0
    %265 = vmatpush.msra.mxu0 0.0
    %266 = vmatpush.msra.mxu0 0.0
    %267 = vmatpush.msra.mxu0 0.0
    %268 = vmatpush.msra.mxu0 0.0
    %269 = vmatpush.msra.mxu0 0.0
    %270 = vmatpush.msra.mxu0 0.0
    %271 = vmatpush.msra.mxu0 0.0
    %272 = vmatpush.msra.mxu0 %v252
    %273 = vmatpush.msra.mxu0 %v251
    %274 = vmatpush.msra.mxu0 %v250
    %275 = vmatpush.msra.mxu0 %v249
    %276 = vmatmul.f32.gmra.mxu0 %v258
    %v277 = vpop.f32.mrf.mxu0
    %v278 = vadd.f32 %v255, %v277
    %279 = vdwg.mxu0
    %v280 = vlaneseq
    %v281 = vand.u32 %v280, 127
    %vm282 = vcmp.lt.s32.totalorder %v281, 8
    %vm283 = vcmp.eq.s32.totalorder %v281, 8
    %v284 = vsel %vm282, 1, 0
    %vm285 = vcmp.eq.s32.totalorder %v284, 1
    %v286 = vsel %vm285, %v278, -1e+30
    %287 = vmax.xlane.f32.xlu0 %v286
    %v288 = vpop.xlane.xlu0 %287
    %v289 = vsub.f32 %v286, %v288
    %v290 = vmul.f32 %v289, 1.442695
    %v291 = vpow.pop %v290
    %v292 = vsel %vm285, %v291, 0.0
    %293 = vadd.xlane.f32.xlu0 %v292
    %v294 = vpop.xlane.xlu0 %293
    %v295 = vrcp.pop %v294
    %v296 = vmul.f32 %v294, %v295
    %v297 = vsub.f32 1.0, %v296
    %v298 = vmul.f32 %v295, %v297
    %v299 = vadd.f32 %v295, %v298
    %vm300 = vweird.f32 %v294
    %vm301 = vweird.f32 %v295
    %vm302 = vmor %vm300, %vm301
    %v303 = vsel %vm302, %v295, %v299
    %v304 = vand.u32 2147483647, %v294
    %vm305 = vcmp.eq.f32.partialorder %v304, 8.507059e+37
    %v306 = vand.u32 %v294, 2147483648
    %v307 = vor.u32 1.1754944e-38, %v306
    %v308 = vsel %vm305, %v307, %v303
    %v309 = vmul.f32 %v292, %v308
    %v310 = vsel %vm283, 1, 0
    %vm311 = vcmp.eq.s32.totalorder %v310, 1
    %v312 = vsel %vm311, %v278, %v309
    %313 = vst [vmem:[%s11] sm:$0xff] %v312
    // Predicated region
    $region66: #{policy_forward.1} parent=1 // pred_check
      _
    $region67: #{policy_forward.1} parent=1 // pred_check_branch
      %315 = sbr.rel (0) target = $region69
    $region68: #{policy_forward.1} parent=1 // pred_region
      _
    $region69: #{policy_forward.1} parent=1 // pred_fallthru
      _
    // Predicated region
    $region70: #{policy_forward.1} parent=1 // pred_check
      _
    $region71: #{policy_forward.1} parent=1 // pred_check_branch
      %317 = sbr.rel (0) target = $region73
    $region72: #{policy_forward.1} parent=1 // pred_region
      _
    $region73: #{policy_forward.1} parent=1 // pred_fallthru
      _
    %318 = vsyncpa [#allocation3], 1
    %319 = vsyncpa [#allocation5], 1
    %320 = vsyncpa [#allocation8], 1

</llo_original>
